<compile_context>
chip_gen: v7x
topology: tpu7x:2x2x1
jax: 0.10.0
libtpu: 0.0.40
codegen_flags: <defaults>
</compile_context>

<pallas_src>
import functools
import math

import jax
import jax.numpy as jnp
from jax import lax
from jax.experimental import pallas as pl
from jax.experimental.pallas import tpu as pltpu


def _add_margin_kernel(x_ref, w_ref, inv_x_ref, inv_w_ref, label_ref, out_ref,
                       *, s, m, tn):
    j = pl.program_id(1)                      # class-tile index
    f32 = jnp.float32

    # Raw (un-normalized) similarities on the MXU; contract the last dim of both
    # operands so the weight tile is consumed in its natural row-major layout.
    raw = lax.dot_general(
        x_ref[...], w_ref[...],
        dimension_numbers=(((1,), (1,)), ((), ())),
        preferred_element_type=jnp.float32)   # (tm, tn) f32

    # cos * s via two broadcast multiplies (no (tm,tn) scale temporary).
    scaled = (raw * inv_w_ref[...]) * (f32(s) * inv_x_ref[...])

    # One-hot margin: shift the label into tile-local coordinates once
    # ((tm,1) int add) and compare against a plain lane iota.
    tm_b, tn_b = scaled.shape
    local_label = label_ref[...] - j * tn                       # (tm, 1)
    col_ids = lax.broadcasted_iota(jnp.int32, (tm_b, tn_b), 1)  # (tm, tn)
    margin = jnp.where(col_ids == local_label, f32(s * m), f32(0.0))

    out_ref[...] = (scaled - margin).astype(out_ref.dtype)


def _round_up(a, b):
    return (a + b - 1) // b * b


def add_margin_product(x, weight, label, *, s=30.0, m=0.4, tm=512, tn=512,
                       compute_dtype=None, out_dtype=jnp.float32):
    """x: (B, D), weight: (C, D), label: (B,) int -> (B, C) `out_dtype`."""
    B, D = x.shape
    C, D2 = weight.shape
    assert D == D2, "in_features mismatch"

    # Inverse norms computed once in f32 (matches F.normalize eps=1e-12 on the
    # norm via eps^2 clamp on the sum of squares).
    eps2 = jnp.float32(1e-24)
    xf = x.astype(jnp.float32)
    wf = weight.astype(jnp.float32)
    inv_x = lax.rsqrt(jnp.maximum(jnp.sum(xf * xf, axis=1, keepdims=True), eps2))      # (B, 1)
    inv_w = lax.rsqrt(jnp.maximum(jnp.sum(wf * wf, axis=1, keepdims=True), eps2)).T    # (1, C)

    # Optional reduced-precision MXU operands (norms already taken in f32).
    if compute_dtype is not None:
        x = x.astype(compute_dtype)
        weight = weight.astype(compute_dtype)

    in_bytes = jnp.dtype(x.dtype).itemsize
    out_bytes = jnp.dtype(out_dtype).itemsize
    sub = {4: 8, 2: 16, 1: 32}.get(in_bytes, 8)   # dtype-aware sublane rounding

    # Tile sizes: tm multiple of the sublane quantum, tn multiple of 128 so the
    # output stores stay lane-dense.  Shrink to the (padded) problem when tiny.
    tm = max(sub, min(tm, _round_up(B, sub)))
    tn = max(128, min(tn, _round_up(C, 128)))

    # Double-buffered VMEM estimate; shrink tiles if a huge D would overflow.
    def vmem_est(tm_, tn_):
        return (2 * tm_ * D * in_bytes            # x tiles
                + 2 * tn_ * D * in_bytes          # W tiles
                + 2 * tm_ * tn_ * out_bytes       # out tiles
                + 2 * (2 * tm_ + tn_) * 4)        # inv_x, label, inv_w
    budget = 40 << 20
    while vmem_est(tm, tn) > budget and tn > 128:
        tn = max(128, tn // 2)
    while vmem_est(tm, tn) > budget and tm > sub:
        tm = max(sub, _round_up(tm // 2, sub))

    Bp = _round_up(B, tm)
    Cp = _round_up(C, tn)

    # Padding must stay zero-filled: padded W rows give raw == 0, which cancels
    # the large inv_w factor of the padded columns before slicing.
    xp = x if Bp == B else jnp.pad(x, ((0, Bp - B), (0, 0)))
    wp = weight if Cp == C else jnp.pad(weight, ((0, Cp - C), (0, 0)))
    inv_xp = inv_x if Bp == B else jnp.pad(inv_x, ((0, Bp - B), (0, 0)))
    inv_wp = inv_w if Cp == C else jnp.pad(inv_w, ((0, 0), (0, Cp - C)))
    lab = label.astype(jnp.int32).reshape(B, 1)
    labp = lab if Bp == B else jnp.pad(lab, ((0, Bp - B), (0, 0)), constant_values=-1)

    kernel = functools.partial(_add_margin_kernel, s=float(s), m=float(m), tn=tn)
    vmem_limit = int(min(max(vmem_est(tm, tn) + (8 << 20), 32 << 20), 56 << 20))

    out = pl.pallas_call(
        kernel,
        out_shape=jax.ShapeDtypeStruct((Bp, Cp), out_dtype),
        grid_spec=pltpu.PrefetchScalarGridSpec(
            num_scalar_prefetch=0,
            grid=(Bp // tm, Cp // tn),
            in_specs=[
                pl.BlockSpec((tm, D), lambda i, j: (i, 0)),   # x (resident across j)
                pl.BlockSpec((tn, D), lambda i, j: (j, 0)),   # W (streamed on inner axis)
                pl.BlockSpec((tm, 1), lambda i, j: (i, 0)),   # inv_x
                pl.BlockSpec((1, tn), lambda i, j: (0, j)),   # inv_w
                pl.BlockSpec((tm, 1), lambda i, j: (i, 0)),   # label
            ],
            out_specs=pl.BlockSpec((tm, tn), lambda i, j: (i, j)),
        ),
        compiler_params=pltpu.CompilerParams(
            dimension_semantics=("parallel", "parallel"),
            vmem_limit_bytes=vmem_limit),
    )(xp, wp, inv_xp, inv_wp, labp)
    return out[:B, :C]


def xavier_uniform(key, shape, dtype=jnp.float32):
    # nn.init.xavier_uniform_ for a (out_features, in_features) weight.
    fan_out, fan_in = shape
    bound = math.sqrt(6.0 / (fan_in + fan_out))
    return jax.random.uniform(key, shape, dtype, minval=-bound, maxval=bound)


def _reference(x, weight, label, s, m):
    xn = x / jnp.maximum(jnp.linalg.norm(x, axis=1, keepdims=True), 1e-12)
    wn = weight / jnp.maximum(jnp.linalg.norm(weight, axis=1, keepdims=True), 1e-12)
    cos = xn @ wn.T
    one_hot = jax.nn.one_hot(label, weight.shape[0], dtype=jnp.float32)
    return s * (one_hot * (cos - m) + (1.0 - one_hot) * cos)


if __name__ == "__main__":
    s, m = 30.0, 0.4
    key = jax.random.PRNGKey(0)

    # Small shape consistent with the module.
    in_features, out_features, batch = 32, 16, 8
    kx, kw, kl, k2 = jax.random.split(key, 4)
    x = jax.random.normal(kx, (batch, in_features), dtype=jnp.float32)
    weight = xavier_uniform(kw, (out_features, in_features))
    label = jax.random.randint(kl, (batch,), 0, out_features, dtype=jnp.int32)

    out = jax.block_until_ready(add_margin_product(x, weight, label, s=s, m=m))
    ref = _reference(x, weight, label, s, m)
    assert out.shape == (batch, out_features)
    assert jnp.allclose(out, ref, atol=1e-4, rtol=1e-4)

    # Second check exercising multiple grid tiles + padding (B, C not tile multiples).
    kx2, kw2, kl2 = jax.random.split(k2, 3)
    B2, C2, D2 = 20, 300, 64
    x2 = jax.random.normal(kx2, (B2, D2), dtype=jnp.float32)
    w2 = xavier_uniform(kw2, (C2, D2))
    l2 = jax.random.randint(kl2, (B2,), 0, C2, dtype=jnp.int32)
    out2 = jax.block_until_ready(
        add_margin_product(x2, w2, l2, s=s, m=m, tm=16, tn=128))
    ref2 = _reference(x2, w2, l2, s, m)
    assert out2.shape == (B2, C2)
    assert jnp.allclose(out2, ref2, atol=1e-4, rtol=1e-4)

    print("KERNEL_OK")
</pallas_src>

<mosaic_0001>
module attributes {stable_mosaic.version = 11 : i64} {
  func.func @_add_margin_kernel(%arg0: i32, %arg1: i32, %arg2: memref<8x32xf32, #tpu.memory_space<vmem>>, %arg3: memref<128x32xf32, #tpu.memory_space<vmem>>, %arg4: memref<8x1xf32, #tpu.memory_space<vmem>>, %arg5: memref<1x128xf32, #tpu.memory_space<vmem>>, %arg6: memref<8x1xi32, #tpu.memory_space<vmem>>, %arg7: memref<8x128xf32, #tpu.memory_space<vmem>>) attributes {dimension_semantics = [#tpu.dimension_semantics<parallel>, #tpu.dimension_semantics<parallel>], iteration_bounds = array<i64: 1, 1>, scalar_prefetch = 0 : i64, scratch_operands = 0 : i64, tpu.core_type = #tpu.core_type<tc>, window_params = [{transform_indices = @transform_0, window_bounds = array<i64: 8, 32>}, {transform_indices = @transform_1, window_bounds = array<i64: 128, 32>}, {transform_indices = @transform_2, window_bounds = array<i64: 8, 1>}, {transform_indices = @transform_3, window_bounds = array<i64: 1, 128>}, {transform_indices = @transform_4, window_bounds = array<i64: 8, 1>}, {transform_indices = @transform_5, window_bounds = array<i64: 8, 128>}]} {
    %c0 = arith.constant 0 : index
    %c0_0 = arith.constant 0 : index
    %0 = vector.load %arg2[%c0, %c0_0] : memref<8x32xf32, #tpu.memory_space<vmem>>, vector<8x32xf32>
    %c0_1 = arith.constant 0 : index
    %c0_2 = arith.constant 0 : index
    %1 = vector.load %arg3[%c0_1, %c0_2] : memref<128x32xf32, #tpu.memory_space<vmem>>, vector<128x32xf32>
    %cst = arith.constant dense<0.000000e+00> : vector<8x128xf32>
    %2 = tpu.matmul %0, %1, %cst {dimension_numbers = #tpu.dot_dimension_numbers<[1], [1], [0], [0], [0, 0, 1, 0], [], []>} : vector<8x32xf32>, vector<128x32xf32>, vector<8x128xf32> -> vector<8x128xf32>
    %c0_3 = arith.constant 0 : index
    %c0_4 = arith.constant 0 : index
    %3 = vector.load %arg5[%c0_3, %c0_4] : memref<1x128xf32, #tpu.memory_space<vmem>>, vector<1x128xf32>
    %4 = vector.broadcast %3 : vector<1x128xf32> to vector<8x128xf32>
    %5 = arith.mulf %2, %4 : vector<8x128xf32>
    %c0_5 = arith.constant 0 : index
    %c0_6 = arith.constant 0 : index
    %6 = vector.load %arg4[%c0_5, %c0_6] : memref<8x1xf32, #tpu.memory_space<vmem>>, vector<8x1xf32>
    %cst_7 = arith.constant 3.000000e+01 : f32
    %7 = vector.broadcast %cst_7 : f32 to vector<8x1xf32>
    %8 = arith.mulf %7, %6 : vector<8x1xf32>
    %9 = vector.broadcast %8 : vector<8x1xf32> to vector<8x128xf32>
    %10 = arith.mulf %5, %9 : vector<8x128xf32>
    %c0_8 = arith.constant 0 : index
    %c0_9 = arith.constant 0 : index
    %11 = vector.load %arg6[%c0_8, %c0_9] : memref<8x1xi32, #tpu.memory_space<vmem>>, vector<8x1xi32>
    %c128_i32 = arith.constant 128 : i32
    %12 = arith.muli %arg1, %c128_i32 : i32
    %13 = vector.broadcast %12 : i32 to vector<8x1xi32>
    %14 = arith.subi %11, %13 : vector<8x1xi32>
    %15 = tpu.iota {dimensions = array<i32: 1>} : vector<8x128xi32>
    %16 = vector.broadcast %14 : vector<8x1xi32> to vector<8x128xi32>
    %17 = arith.cmpi eq, %15, %16 : vector<8x128xi32>
    %cst_10 = arith.constant 1.200000e+01 : f32
    %cst_11 = arith.constant 0.000000e+00 : f32
    %18 = vector.broadcast %cst_10 : f32 to vector<8x128xf32>
    %19 = vector.broadcast %cst_11 : f32 to vector<8x128xf32>
    %20 = arith.select %17, %18, %19 : vector<8x128xi1>, vector<8x128xf32>
    %21 = arith.subf %10, %20 : vector<8x128xf32>
    %c0_12 = arith.constant 0 : index
    %c0_13 = arith.constant 0 : index
    %22 = vector.load %arg7[%c0_12, %c0_13] : memref<8x128xf32, #tpu.memory_space<vmem>>, vector<8x128xf32>
    tpu.vector_store %arg7[%c0_12, %c0_13], %21 {strides = array<i32>} : memref<8x128xf32, #tpu.memory_space<vmem>>, vector<8x128xf32>,
    return
  }
  func.func @transform_0(%arg0: i32, %arg1: i32) -> (i32, i32) {
    %c0_i32 = arith.constant 0 : i32
    %c0_i32_0 = arith.constant 0 : i32
    return %arg0, %c0_i32 : i32, i32
  }
  func.func @transform_1(%arg0: i32, %arg1: i32) -> (i32, i32) {
    %c0_i32 = arith.constant 0 : i32
    %c0_i32_0 = arith.constant 0 : i32
    return %arg1, %c0_i32 : i32, i32
  }
  func.func @transform_2(%arg0: i32, %arg1: i32) -> (i32, i32) {
    %c0_i32 = arith.constant 0 : i32
    %c0_i32_0 = arith.constant 0 : i32
    return %arg0, %c0_i32 : i32, i32
  }
  func.func @transform_3(%arg0: i32, %arg1: i32) -> (i32, i32) {
    %c0_i32 = arith.constant 0 : i32
    %c0_i32_0 = arith.constant 0 : i32
    return %c0_i32, %arg1 : i32, i32
  }
  func.func @transform_4(%arg0: i32, %arg1: i32) -> (i32, i32) {
    %c0_i32 = arith.constant 0 : i32
    %c0_i32_0 = arith.constant 0 : i32
    return %arg0, %c0_i32 : i32, i32
  }
  func.func @transform_5(%arg0: i32, %arg1: i32) -> (i32, i32) {
    %c0_i32 = arith.constant 0 : i32
    return %arg0, %arg1 : i32, i32
  }
}

</mosaic_0001>

<llo_original>
// kernel: tpu_custom_call.1
$region0: #{tpu_custom_call.1}
  #allocation0 [shape = 'u32[]', space=smem, size = 0x4, offset = 0x4, fixed_abs, tag = 'smem constant byte address 0x4 - core index']
  #allocation1 [shape = 'u32[144,128]{1,0:T(1,128)}', space=vmem, size = 0x12000, scoped, tag = 'internal scratch']
  %s0 = inlined_call_operand.vmem [shape: f32[8,32], index: 0, kind: input, shape index: {}]
  %s1 = inlined_call_operand.vmem [shape: f32[128,32], index: 1, kind: input, shape index: {}]
  %s2 = inlined_call_operand.vmem [shape: f32[8,1], index: 2, kind: input, shape index: {}]
  %s3 = inlined_call_operand.vmem [shape: f32[1,128], index: 3, kind: input, shape index: {}]
  %s4 = inlined_call_operand.vmem [shape: s32[8,1], index: 4, kind: input, shape index: {}]
  %s5 = inlined_call_operand.hbm [shape: f32[8,128], index: 5, kind: output, shape index: {}]
  %s6 = sld [smem:[#allocation0]]
  $region30: #{tpu_custom_call.1} parent=0
    _
  %s8 = ssub.s32 1, %s6
  %s9 = scalar_select 0, %s8, %s6
  $region1: #{tpu_custom_call.1} parent=0
    #allocation2 [shape = 'u8[4096]{0}', space=vmem, size = 0x1000, scoped, tag = 'output window, operand 0, single buffered']
    #allocation3 [shape = 's32[1]{0}', space=sflag, size = 0x4, scoped, tag = 'scoped memory for tpu_custom_call.1']
    %10 = vsyncpa [#allocation3], 0
    // Predicated region
    $region2: #{tpu_custom_call.1} parent=1 // pred_check
      _
    $region3: #{tpu_custom_call.1} parent=1 // pred_check_branch
      %12 = sbr.rel (0) target = $region5
    $region4: #{tpu_custom_call.1} parent=1 // pred_region
      _
    $region5: #{tpu_custom_call.1} parent=1 // pred_fallthru
      _
    // Predicated region
    $region6: #{tpu_custom_call.1} parent=1 // pred_check
      _
    $region7: #{tpu_custom_call.1} parent=1 // pred_check_branch
      %14 = sbr.rel (0) target = $region9
    $region8: #{tpu_custom_call.1} parent=1 // pred_region
      _
    $region9: #{tpu_custom_call.1} parent=1 // pred_fallthru
      _
    // Predicated region
    $region10: #{tpu_custom_call.1} parent=1 // pred_check
      _
    $region11: #{tpu_custom_call.1} parent=1 // pred_check_branch
      %16 = sbr.rel (0) target = $region13
    $region12: #{tpu_custom_call.1} parent=1 // pred_region
      _
    $region13: #{tpu_custom_call.1} parent=1 // pred_fallthru
      _
    // Predicated region
    $region14: #{tpu_custom_call.1} parent=1 // pred_check
      _
    $region15: #{tpu_custom_call.1} parent=1 // pred_check_branch
      %18 = sbr.rel (0) target = $region17
    $region16: #{tpu_custom_call.1} parent=1 // pred_region
      _
    $region17: #{tpu_custom_call.1} parent=1 // pred_fallthru
      _
    // Predicated region
    $region18: #{tpu_custom_call.1} parent=1 // pred_check
      _
    $region19: #{tpu_custom_call.1} parent=1 // pred_check_branch
      %20 = sbr.rel (0) target = $region21
    $region20: #{tpu_custom_call.1} parent=1 // pred_region
      _
    $region21: #{tpu_custom_call.1} parent=1 // pred_fallthru
      _
    %v21 = vld [vmem:[%s0] sm:$0xff]
    %v22 = vld [vmem:[%s1] sm:$0xff]
    %v23 = vld [vmem:[%s1 + $0x8] sm:$0xff]
    %v24 = vld [vmem:[%s1 + $0x10] sm:$0xff]
    %v25 = vld [vmem:[%s1 + $0x18] sm:$0xff]
    %v26 = vld [vmem:[%s1 + $0x20] sm:$0xff]
    %v27 = vld [vmem:[%s1 + $0x28] sm:$0xff]
    %v28 = vld [vmem:[%s1 + $0x30] sm:$0xff]
    %v29 = vld [vmem:[%s1 + $0x38] sm:$0xff]
    %v30 = vld [vmem:[%s1 + $0x40] sm:$0xff]
    %v31 = vld [vmem:[%s1 + $0x48] sm:$0xff]
    %v32 = vld [vmem:[%s1 + $0x50] sm:$0xff]
    %v33 = vld [vmem:[%s1 + $0x58] sm:$0xff]
    %v34 = vld [vmem:[%s1 + $0x60] sm:$0xff]
    %v35 = vld [vmem:[%s1 + $0x68] sm:$0xff]
    %v36 = vld [vmem:[%s1 + $0x70] sm:$0xff]
    %v37 = vld [vmem:[%s1 + $0x78] sm:$0xff]
    %vm38 = vcmask 261120
    %v40 = vsel %vm38, %v21, 0
    %v43 = vsel %vm38, %v22, 0
    %v46 = vsel %vm38, %v23, 0
    %v49 = vsel %vm38, %v24, 0
    %v52 = vsel %vm38, %v25, 0
    %v55 = vsel %vm38, %v26, 0
    %v58 = vsel %vm38, %v27, 0
    %v61 = vsel %vm38, %v28, 0
    %v64 = vsel %vm38, %v29, 0
    %v67 = vsel %vm38, %v30, 0
    %v70 = vsel %vm38, %v31, 0
    %v73 = vsel %vm38, %v32, 0
    %v76 = vsel %vm38, %v33, 0
    %v79 = vsel %vm38, %v34, 0
    %v82 = vsel %vm38, %v35, 0
    %v85 = vsel %vm38, %v36, 0
    %v88 = vsel %vm38, %v37, 0
    %90 = vmatprep.subr.mxu0 0.0
    %91 = vmatpush1.xpose.msra.mxu0 %v43
    %92 = vmatprep.subr.mxu0 0.0
    %93 = vmatpush1.xpose.msra.mxu0 %v46
    %94 = vmatprep.subr.mxu0 0.0
    %95 = vmatpush1.xpose.msra.mxu0 %v49
    %96 = vmatprep.subr.mxu0 0.0
    %97 = vmatpush1.xpose.msra.mxu0 %v52
    %98 = vmatprep.subr.mxu0 0.0
    %99 = vmatpush1.xpose.msra.mxu0 %v55
    %100 = vmatprep.subr.mxu0 0.0
    %101 = vmatpush1.xpose.msra.mxu0 %v58
    %102 = vmatprep.subr.mxu0 0.0
    %103 = vmatpush1.xpose.msra.mxu0 %v61
    %104 = vmatprep.subr.mxu0 0.0
    %105 = vmatpush1.xpose.msra.mxu0 %v64
    %106 = vmatprep.subr.mxu0 0.0
    %107 = vmatpush1.xpose.msra.mxu0 %v67
    %108 = vmatprep.subr.mxu0 0.0
    %109 = vmatpush1.xpose.msra.mxu0 %v70
    %110 = vmatprep.subr.mxu0 0.0
    %111 = vmatpush1.xpose.msra.mxu0 %v73
    %112 = vmatprep.subr.mxu0 0.0
    %113 = vmatpush1.xpose.msra.mxu0 %v76
    %114 = vmatprep.subr.mxu0 0.0
    %115 = vmatpush1.xpose.msra.mxu0 %v79
    %116 = vmatprep.subr.mxu0 0.0
    %117 = vmatpush1.xpose.msra.mxu0 %v82
    %118 = vmatprep.subr.mxu0 0.0
    %119 = vmatpush1.xpose.msra.mxu0 %v85
    %120 = vmatprep.subr.mxu0 0.0
    %121 = vmatpush1.xpose.msra.mxu0 %v88
    %122 = vmatprep.subr.mxu0 0.0
    %123 = vmatpush1.xpose.msra.mxu0 0.0
    %124 = vmatprep.subr.mxu0 0.0
    %125 = vmatpush1.xpose.msra.mxu0 0.0
    %126 = vmatprep.subr.mxu0 0.0
    %127 = vmatpush1.xpose.msra.mxu0 0.0
    %128 = vmatprep.subr.mxu0 0.0
    %129 = vmatpush1.xpose.msra.mxu0 0.0
    %130 = vmatprep.subr.mxu0 0.0
    %131 = vmatpush1.xpose.msra.mxu0 0.0
    %132 = vmatprep.subr.mxu0 0.0
    %133 = vmatpush1.xpose.msra.mxu0 0.0
    %134 = vmatprep.subr.mxu0 0.0
    %135 = vmatpush1.xpose.msra.mxu0 0.0
    %136 = vmatprep.subr.mxu0 0.0
    %137 = vmatpush1.xpose.msra.mxu0 0.0
    %138 = vmatprep.subr.mxu0 0.0
    %139 = vmatpush1.xpose.msra.mxu0 0.0
    %140 = vmatprep.subr.mxu0 0.0
    %141 = vmatpush1.xpose.msra.mxu0 0.0
    %142 = vmatprep.subr.mxu0 0.0
    %143 = vmatpush1.xpose.msra.mxu0 0.0
    %144 = vmatprep.subr.mxu0 0.0
    %145 = vmatpush1.xpose.msra.mxu0 0.0
    %146 = vmatprep.subr.mxu0 0.0
    %147 = vmatpush1.xpose.msra.mxu0 0.0
    %148 = vmatprep.subr.mxu0 0.0
    %149 = vmatpush1.xpose.msra.mxu0 0.0
    %150 = vmatprep.subr.mxu0 0.0
    %151 = vmatpush1.xpose.msra.mxu0 0.0
    %152 = vmatprep.subr.mxu0 0.0
    %153 = vmatpush1.xpose.msra.mxu0 0.0
    %154 = vmatprep.mubr.f32.mxu0 0.0
    %155 = vmatmul.mubr.f32.gmra.mrb[0].mxu0 %v40
    %v156 = vpop.f32.mrb[0].mxu0
    %v157 = vadd.f32 0.0, %v156
    %v158 = vpop.f32.mrb[0].mxu0
    %159 = vdwg.mxu0
    %v160 = vld [vmem:[%s3] sm:$0x1]
    %v162 = vlaneseq
    %v163 = vshrl.u32 %v162, 7
    %v164 = vsub.s32 0, %v163
    %v165 = vrot.slane %v160, %v164
    %v167 = vmul.f32 %v157, %v165
    %v168 = vld [vmem:[%s2] sm:$0xff]
    %v169 = vmul.f32 %v168, 30.0
    %171 = vset.pattern.permute.xlu0 0
    %172 = vperm.xlu0 %171, %v169
    %v173 = vpop.permute.xlu0 %172
    %v175 = vmul.f32 %v167, %v173
    %v176 = vld [vmem:[%s4] sm:$0xff]
    %s177 = smul.u32 0, 128
    %v178 = vstv %s177
    %v179 = vsub.s32 %v176, %v178
    %v180 = vlaneseq
    %v181 = vand.u32 %v180, 127
    %182 = vset.pattern.permute.xlu0 0
    %183 = vperm.xlu0 %182, %v179
    %v184 = vpop.permute.xlu0 %183
    %vm185 = vcmp.eq.s32.totalorder %v181, %v184
    %v186 = vsel %vm185, 12.0, 0.0
    %v187 = vsub.f32 %v175, %v186
    %188 = vst [vmem:[#allocation2] sm:$0xff] %v187
    // Predicated region
    $region22: #{tpu_custom_call.1} parent=1 // pred_check
      _
    $region23: #{tpu_custom_call.1} parent=1 // pred_check_branch
      %190 = sbr.rel (0) target = $region25
    $region24: #{tpu_custom_call.1} parent=1 // pred_region
      %s192 = ssub.s32 128, 128
      %193 = vsyncadd [#allocation3], %s192
      %s195 = sshll.u32 [#allocation2], 4
      %s196 = int_to_ptr.vmem [resolvable:$true] %s195
      %198 = dma.vmem_to_hbm [thread:$0]  %s196, 128, %s5, [#allocation3]
    $region25: #{tpu_custom_call.1} parent=1 // pred_fallthru
      _
    // Predicated region
    $region26: #{tpu_custom_call.1} parent=1 // pred_check
      _
    $region27: #{tpu_custom_call.1} parent=1 // pred_check_branch
      %200 = sbr.rel (0) target = $region29
    $region28: #{tpu_custom_call.1} parent=1 // pred_region
      %201 = dma.done [#allocation3], 128
    $region29: #{tpu_custom_call.1} parent=1 // pred_fallthru
      _
    %202 = vsyncpa [#allocation3], 1

</llo_original>
